<compile_context>
chip_gen: v7x
topology: tpu7x:2x2x1
jax: 0.10.0
libtpu: 0.0.40
codegen_flags: <defaults>
</compile_context>

<pallas_src>
import functools
import math

import jax
import jax.numpy as jnp
from jax.experimental import pallas as pl
from jax.experimental.pallas import tpu as pltpu

LOG_STD_MIN = -20.0
LOG_STD_MAX = 2.0
LOG_2PI = math.log(2.0 * math.pi)
LOG_2 = math.log(2.0)
LANE = 128


def _round_up(x, m):
    return ((x + m - 1) // m) * m


def _log1m_tanh2(pre):
    """log(1 - tanh(pre)^2), computed stably from the pre-squash value."""
    # TODO(synk): original reference uses log(1 - tanh(pre)^2 + 1e-6); this exact
    # form matches it for moderate |pre| and is correct (not eps-clamped) in the tails.
    t = -2.0 * pre
    softplus = jnp.maximum(t, 0.0) + jnp.log1p(jnp.exp(-jnp.abs(t)))
    return 2.0 * (LOG_2 - pre - softplus)


def _sac_actor_kernel(*refs, a_half, act_dim, deterministic):
    if deterministic:
        (obs_ref, w1_ref, b1_ref, w2_ref, b2_ref, wh_ref, bh_ref,
         act_ref, logp_ref) = refs
    else:
        (obs_ref, noise_ref, w1_ref, b1_ref, w2_ref, b2_ref, wh_ref, bh_ref,
         act_ref, logp_ref) = refs

    x = obs_ref[...]                                                   # bf16 [TB, Dp]

    # MLP trunk: bf16 operands on the MXU, f32 accumulation, f32 elementwise.
    h1 = jnp.dot(x, w1_ref[...], preferred_element_type=jnp.float32) + b1_ref[...]
    h1 = jnp.maximum(h1, 0.0).astype(jnp.bfloat16)
    h2 = jnp.dot(h1, w2_ref[...], preferred_element_type=jnp.float32) + b2_ref[...]
    h2 = jnp.maximum(h2, 0.0).astype(jnp.bfloat16)

    # Fused mu / log_std head: one [TB, 2*A_pad] GEMM, sliced at the lane-tile boundary.
    head = jnp.dot(h2, wh_ref[...], preferred_element_type=jnp.float32) + bh_ref[...]
    mu = head[:, :a_half]
    log_std = jnp.clip(head[:, a_half:], LOG_STD_MIN, LOG_STD_MAX)

    if deterministic:
        pre = mu
        gauss = -log_std - 0.5 * LOG_2PI                               # noise == 0
    else:
        noise = noise_ref[...]                                         # f32 [TB, A_pad]
        pre = mu + jnp.exp(log_std) * noise
        gauss = -0.5 * jnp.square(noise) - log_std - 0.5 * LOG_2PI

    action = jnp.tanh(pre)
    logp_elem = gauss - _log1m_tanh2(pre)

    # Mask out the zero-padded action lanes before the reduction.
    lane = jax.lax.broadcasted_iota(jnp.int32, logp_elem.shape, 1)
    logp_elem = jnp.where(lane < act_dim, logp_elem, 0.0)

    act_ref[...] = action.astype(act_ref.dtype)
    logp_ref[...] = jnp.sum(logp_elem, axis=-1, keepdims=True).astype(logp_ref.dtype)


def _pad2(x, rows, cols, dtype):
    out = jnp.zeros((rows, cols), dtype)
    return out.at[: x.shape[0], : x.shape[1]].set(x.astype(dtype))


def sac_actor_forward(params, obs, noise=None, deterministic=False, tile_b=None):
    """Returns (action, log_prob, stats_dict) like SACActor.forward."""
    B, obs_dim = obs.shape
    hidden = params["w1"].shape[1]
    A = params["wmu"].shape[1]

    D_p = _round_up(obs_dim, LANE)
    H_p = _round_up(hidden, LANE)
    A_p = _round_up(A, LANE)

    if tile_b is None:
        TILE_B = min(256, _round_up(B, 8))
    else:
        TILE_B = _round_up(tile_b, 8)
    B_p = _round_up(B, TILE_B)

    # --- pack & pad parameters (bf16 weights for the MXU, f32 biases) ------------
    w1 = _pad2(params["w1"], D_p, H_p, jnp.bfloat16)
    b1 = _pad2(params["b1"], 1, H_p, jnp.float32)
    w2 = _pad2(params["w2"], H_p, H_p, jnp.bfloat16)
    b2 = _pad2(params["b2"], 1, H_p, jnp.float32)
    wh = jnp.zeros((H_p, 2 * A_p), jnp.float32)
    wh = wh.at[:hidden, :A].set(params["wmu"])
    wh = wh.at[:hidden, A_p:A_p + A].set(params["wls"])
    wh = wh.astype(jnp.bfloat16)
    bh = jnp.zeros((1, 2 * A_p), jnp.float32)
    bh = bh.at[:, :A].set(params["bmu"])
    bh = bh.at[:, A_p:A_p + A].set(params["bls"])

    obs_p = jnp.zeros((B_p, D_p), jnp.bfloat16).at[:B, :obs_dim].set(
        obs.astype(jnp.bfloat16))

    # --- specs -------------------------------------------------------------------
    def batch_map(i):
        return (i, 0)

    def const_map(i):
        return (0, 0)

    in_arrays = [obs_p]
    in_specs = [pl.BlockSpec((TILE_B, D_p), batch_map)]
    if not deterministic:
        if noise is None:
            raise ValueError("noise is required when deterministic=False")
        noise_p = jnp.zeros((B_p, A_p), jnp.float32).at[:B, :A].set(
            noise.astype(jnp.float32))
        in_arrays.append(noise_p)
        in_specs.append(pl.BlockSpec((TILE_B, A_p), batch_map))

    weights = [w1, b1, w2, b2, wh, bh]
    in_arrays += weights
    # Constant block index -> weights stay VMEM-resident across the batch grid.
    in_specs += [pl.BlockSpec(tuple(w.shape), const_map) for w in weights]

    kernel = functools.partial(
        _sac_actor_kernel, a_half=A_p, act_dim=A, deterministic=deterministic)

    flops = 2 * B_p * (D_p * H_p + H_p * H_p + H_p * 2 * A_p)
    transcendentals = 6 * B_p * A_p
    bytes_accessed = (
        sum(int(math.prod(a.shape)) * a.dtype.itemsize for a in in_arrays)
        + B_p * A_p * 4 + B_p * 4)

    action_p, log_prob_p = pl.pallas_call(
        kernel,
        grid=(B_p // TILE_B,),
        out_shape=(
            jax.ShapeDtypeStruct((B_p, A_p), jnp.float32),
            jax.ShapeDtypeStruct((B_p, 1), jnp.float32),
        ),
        in_specs=in_specs,
        out_specs=(
            pl.BlockSpec((TILE_B, A_p), batch_map),
            pl.BlockSpec((TILE_B, 1), batch_map),
        ),
        compiler_params=pltpu.CompilerParams(
            dimension_semantics=("parallel",),
            vmem_limit_bytes=32 * 1024 * 1024,
        ),
        cost_estimate=pl.CostEstimate(
            flops=flops,
            transcendentals=transcendentals,
            bytes_accessed=bytes_accessed,
        ),
    )(*in_arrays)

    action = action_p[:B, :A]
    log_prob = log_prob_p[:B, :]
    return action, log_prob, {}


def init_params(key, obs_dim, hidden, act_dim):
    ks = jax.random.split(key, 4)

    def dense(k, fan_in, fan_out):
        lim = 1.0 / math.sqrt(fan_in)
        w = jax.random.uniform(k, (fan_in, fan_out), jnp.float32, -lim, lim)
        b = jnp.zeros((1, fan_out), jnp.float32)
        return w, b

    w1, b1 = dense(ks[0], obs_dim, hidden)
    w2, b2 = dense(ks[1], hidden, hidden)
    wmu, bmu = dense(ks[2], hidden, act_dim)
    wls, bls = dense(ks[3], hidden, act_dim)
    return {
        "w1": w1, "b1": b1, "w2": w2, "b2": b2,
        "wmu": wmu, "bmu": bmu, "wls": wls, "bls": bls,
        # SACActor.__init__: log_entropy_scaling (used only in loss(), not forward)
        "log_entropy_scaling": jnp.asarray(math.log(0.2), jnp.float32),
    }


def reference_forward(params, obs, noise, deterministic=False):
    """Plain-JAX mirror of the kernel pipeline (bf16 MXU operands, f32 elementwise)."""
    if deterministic:
        noise = jnp.zeros_like(noise)
    bf = lambda x: x.astype(jnp.bfloat16)
    h1 = jnp.maximum(
        jnp.dot(bf(obs), bf(params["w1"]), preferred_element_type=jnp.float32)
        + params["b1"], 0.0)
    h2 = jnp.maximum(
        jnp.dot(bf(h1), bf(params["w2"]), preferred_element_type=jnp.float32)
        + params["b2"], 0.0)
    mu = (jnp.dot(bf(h2), bf(params["wmu"]), preferred_element_type=jnp.float32)
          + params["bmu"])
    log_std = jnp.clip(
        jnp.dot(bf(h2), bf(params["wls"]), preferred_element_type=jnp.float32)
        + params["bls"], LOG_STD_MIN, LOG_STD_MAX)
    pre = mu + jnp.exp(log_std) * noise
    action = jnp.tanh(pre)
    logp = -0.5 * noise ** 2 - log_std - 0.5 * LOG_2PI
    logp = logp - _log1m_tanh2(pre)
    return action, jnp.sum(logp, axis=-1, keepdims=True)


if __name__ == "__main__":
    B, OBS, HID, ACT = 24, 16, 32, 4

    key = jax.random.PRNGKey(0)
    k_param, k_obs, k_noise = jax.random.split(key, 3)

    params = init_params(k_param, OBS, HID, ACT)
    obs = jax.random.normal(k_obs, (B, OBS), jnp.float32)
    noise = jax.random.normal(k_noise, (B, ACT), jnp.float32)

    # Stochastic path; tile_b=8 -> batch grid of 3 steps with weights resident.
    fwd = jax.jit(lambda p, o, n: sac_actor_forward(p, o, n, tile_b=8))
    action, log_prob, stats = fwd(params, obs, noise)
    jax.block_until_ready((action, log_prob))

    ref_a, ref_lp = reference_forward(params, obs, noise)
    assert action.shape == (B, ACT) and log_prob.shape == (B, 1)
    assert jnp.allclose(action, ref_a, atol=1e-4), "action mismatch"
    assert jnp.allclose(log_prob, ref_lp, atol=1e-3), "log_prob mismatch"

    # Deterministic path: specialized kernel variant with no noise input at all.
    det_fwd = jax.jit(
        lambda p, o: sac_actor_forward(p, o, None, deterministic=True, tile_b=8))
    det_a, det_lp, _ = det_fwd(params, obs)
    jax.block_until_ready((det_a, det_lp))

    ref_da, ref_dlp = reference_forward(params, obs, noise, deterministic=True)
    assert jnp.allclose(det_a, ref_da, atol=1e-4), "deterministic action mismatch"
    assert jnp.allclose(det_lp, ref_dlp, atol=1e-3), "deterministic log_prob mismatch"

    print("KERNEL_OK")
</pallas_src>

<mosaic_0001>
module attributes {stable_mosaic.version = 11 : i64} {
  func.func @_sac_actor_kernel(%arg0: i32, %arg1: memref<8x128xbf16, #tpu.memory_space<vmem>>, %arg2: memref<8x128xf32, #tpu.memory_space<vmem>>, %arg3: memref<128x128xbf16, #tpu.memory_space<vmem>>, %arg4: memref<1x128xf32, #tpu.memory_space<vmem>>, %arg5: memref<128x128xbf16, #tpu.memory_space<vmem>>, %arg6: memref<1x128xf32, #tpu.memory_space<vmem>>, %arg7: memref<128x256xbf16, #tpu.memory_space<vmem>>, %arg8: memref<1x256xf32, #tpu.memory_space<vmem>>, %arg9: memref<8x128xf32, #tpu.memory_space<vmem>>, %arg10: memref<8x1xf32, #tpu.memory_space<vmem>>) attributes {dimension_semantics = [#tpu.dimension_semantics<parallel>], iteration_bounds = array<i64: 3>, scalar_prefetch = 0 : i64, scratch_operands = 0 : i64, tpu.core_type = #tpu.core_type<tc>, window_params = [{transform_indices = @transform_0, window_bounds = array<i64: 8, 128>}, {transform_indices = @transform_1, window_bounds = array<i64: 8, 128>}, {pipeline_mode = #tpu.pipeline_mode<synchronous>, transform_indices = @transform_2, window_bounds = array<i64: 128, 128>}, {pipeline_mode = #tpu.pipeline_mode<synchronous>, transform_indices = @transform_3, window_bounds = array<i64: 1, 128>}, {pipeline_mode = #tpu.pipeline_mode<synchronous>, transform_indices = @transform_4, window_bounds = array<i64: 128, 128>}, {pipeline_mode = #tpu.pipeline_mode<synchronous>, transform_indices = @transform_5, window_bounds = array<i64: 1, 128>}, {pipeline_mode = #tpu.pipeline_mode<synchronous>, transform_indices = @transform_6, window_bounds = array<i64: 128, 256>}, {pipeline_mode = #tpu.pipeline_mode<synchronous>, transform_indices = @transform_7, window_bounds = array<i64: 1, 256>}, {transform_indices = @transform_8, window_bounds = array<i64: 8, 128>}, {transform_indices = @transform_9, window_bounds = array<i64: 8, 1>}]} {
    %c0 = arith.constant 0 : index
    %c0_0 = arith.constant 0 : index
    %0 = vector.load %arg1[%c0, %c0_0] : memref<8x128xbf16, #tpu.memory_space<vmem>>, vector<8x128xbf16>
    %c0_1 = arith.constant 0 : index
    %c0_2 = arith.constant 0 : index
    %1 = vector.load %arg3[%c0_1, %c0_2] : memref<128x128xbf16, #tpu.memory_space<vmem>>, vector<128x128xbf16>
    %cst = arith.constant dense<0.000000e+00> : vector<8x128xf32>
    %2 = tpu.matmul %0, %1, %cst {dimension_numbers = #tpu.dot_dimension_numbers<[1], [0], [0], [1], [0, 0, 1, 1], [], []>} : vector<8x128xbf16>, vector<128x128xbf16>, vector<8x128xf32> -> vector<8x128xf32>
    %c0_3 = arith.constant 0 : index
    %c0_4 = arith.constant 0 : index
    %3 = vector.load %arg4[%c0_3, %c0_4] : memref<1x128xf32, #tpu.memory_space<vmem>>, vector<1x128xf32>
    %4 = vector.broadcast %3 : vector<1x128xf32> to vector<8x128xf32>
    %5 = arith.addf %2, %4 : vector<8x128xf32>
    %cst_5 = arith.constant 0.000000e+00 : f32
    %6 = vector.broadcast %cst_5 : f32 to vector<8x128xf32>
    %7 = arith.maximumf %5, %6 : vector<8x128xf32>
    %8 = arith.truncf %7 : vector<8x128xf32> to vector<8x128xbf16>
    %c0_6 = arith.constant 0 : index
    %c0_7 = arith.constant 0 : index
    %9 = vector.load %arg5[%c0_6, %c0_7] : memref<128x128xbf16, #tpu.memory_space<vmem>>, vector<128x128xbf16>
    %cst_8 = arith.constant dense<0.000000e+00> : vector<8x128xf32>
    %10 = tpu.matmul %8, %9, %cst_8 {dimension_numbers = #tpu.dot_dimension_numbers<[1], [0], [0], [1], [0, 0, 1, 1], [], []>} : vector<8x128xbf16>, vector<128x128xbf16>, vector<8x128xf32> -> vector<8x128xf32>
    %c0_9 = arith.constant 0 : index
    %c0_10 = arith.constant 0 : index
    %11 = vector.load %arg6[%c0_9, %c0_10] : memref<1x128xf32, #tpu.memory_space<vmem>>, vector<1x128xf32>
    %12 = vector.broadcast %11 : vector<1x128xf32> to vector<8x128xf32>
    %13 = arith.addf %10, %12 : vector<8x128xf32>
    %cst_11 = arith.constant 0.000000e+00 : f32
    %14 = vector.broadcast %cst_11 : f32 to vector<8x128xf32>
    %15 = arith.maximumf %13, %14 : vector<8x128xf32>
    %16 = arith.truncf %15 : vector<8x128xf32> to vector<8x128xbf16>
    %c0_12 = arith.constant 0 : index
    %c0_13 = arith.constant 0 : index
    %17 = vector.load %arg7[%c0_12, %c0_13] : memref<128x256xbf16, #tpu.memory_space<vmem>>, vector<128x256xbf16>
    %cst_14 = arith.constant dense<0.000000e+00> : vector<8x256xf32>
    %18 = tpu.matmul %16, %17, %cst_14 {dimension_numbers = #tpu.dot_dimension_numbers<[1], [0], [0], [1], [0, 0, 1, 1], [], []>} : vector<8x128xbf16>, vector<128x256xbf16>, vector<8x256xf32> -> vector<8x256xf32>
    %c0_15 = arith.constant 0 : index
    %c0_16 = arith.constant 0 : index
    %19 = vector.load %arg8[%c0_15, %c0_16] : memref<1x256xf32, #tpu.memory_space<vmem>>, vector<1x256xf32>
    %20 = vector.broadcast %19 : vector<1x256xf32> to vector<8x256xf32>
    %21 = arith.addf %18, %20 : vector<8x256xf32>
    %22 = vector.extract_strided_slice %21 {offsets = [0, 0], sizes = [8, 128], strides = [1, 1]} : vector<8x256xf32> to vector<8x128xf32>
    %23 = vector.extract_strided_slice %21 {offsets = [0, 128], sizes = [8, 128], strides = [1, 1]} : vector<8x256xf32> to vector<8x128xf32>
    %cst_17 = arith.constant -2.000000e+01 : f32
    %cst_18 = arith.constant 2.000000e+00 : f32
    %24 = vector.broadcast %cst_17 : f32 to vector<8x128xf32>
    %25 = arith.maximumf %24, %23 : vector<8x128xf32>
    %26 = vector.broadcast %cst_18 : f32 to vector<8x128xf32>
    %27 = arith.minimumf %26, %25 : vector<8x128xf32>
    %c0_19 = arith.constant 0 : index
    %c0_20 = arith.constant 0 : index
    %28 = vector.load %arg2[%c0_19, %c0_20] : memref<8x128xf32, #tpu.memory_space<vmem>>, vector<8x128xf32>
    %29 = math.exp %27 : vector<8x128xf32>
    %30 = arith.mulf %29, %28 : vector<8x128xf32>
    %31 = arith.addf %22, %30 : vector<8x128xf32>
    %32 = arith.mulf %28, %28 : vector<8x128xf32>
    %cst_21 = arith.constant -5.000000e-01 : f32
    %33 = vector.broadcast %cst_21 : f32 to vector<8x128xf32>
    %34 = arith.mulf %33, %32 : vector<8x128xf32>
    %35 = arith.subf %34, %27 : vector<8x128xf32>
    %cst_22 = arith.constant 0.918938517 : f32
    %36 = vector.broadcast %cst_22 : f32 to vector<8x128xf32>
    %37 = arith.subf %35, %36 : vector<8x128xf32>
    %38 = math.tanh %31 : vector<8x128xf32>
    %cst_23 = arith.constant -2.000000e+00 : f32
    %39 = vector.broadcast %cst_23 : f32 to vector<8x128xf32>
    %40 = arith.mulf %39, %31 : vector<8x128xf32>
    %cst_24 = arith.constant 0.000000e+00 : f32
    %41 = vector.broadcast %cst_24 : f32 to vector<8x128xf32>
    %42 = arith.maximumf %40, %41 : vector<8x128xf32>
    %43 = math.absf %40 : vector<8x128xf32>
    %cst_25 = arith.constant 0.000000e+00 : f32
    %44 = vector.broadcast %cst_25 : f32 to vector<8x128xf32>
    %45 = arith.subf %44, %43 : vector<8x128xf32>
    %46 = math.exp %45 : vector<8x128xf32>
    %47 = math.log1p %46 : vector<8x128xf32>
    %48 = arith.addf %42, %47 : vector<8x128xf32>
    %cst_26 = arith.constant 0.693147182 : f32
    %49 = vector.broadcast %cst_26 : f32 to vector<8x128xf32>
    %50 = arith.subf %49, %31 : vector<8x128xf32>
    %51 = arith.subf %50, %48 : vector<8x128xf32>
    %cst_27 = arith.constant 2.000000e+00 : f32
    %52 = vector.broadcast %cst_27 : f32 to vector<8x128xf32>
    %53 = arith.mulf %52, %51 : vector<8x128xf32>
    %54 = arith.subf %37, %53 : vector<8x128xf32>
    %55 = tpu.iota {dimensions = array<i32: 1>} : vector<8x128xi32>
    %c4_i32 = arith.constant 4 : i32
    %56 = vector.broadcast %c4_i32 : i32 to vector<8x128xi32>
    %57 = arith.cmpi slt, %55, %56 : vector<8x128xi32>
    %cst_28 = arith.constant 0.000000e+00 : f32
    %58 = vector.broadcast %cst_28 : f32 to vector<8x128xf32>
    %59 = arith.select %57, %54, %58 : vector<8x128xi1>, vector<8x128xf32>
    %c0_29 = arith.constant 0 : index
    %c0_30 = arith.constant 0 : index
    %60 = vector.load %arg9[%c0_29, %c0_30] : memref<8x128xf32, #tpu.memory_space<vmem>>, vector<8x128xf32>
    tpu.vector_store %arg9[%c0_29, %c0_30], %38 {strides = array<i32>} : memref<8x128xf32, #tpu.memory_space<vmem>>, vector<8x128xf32>,
    %cst_31 = arith.constant dense<0.000000e+00> : vector<8xf32>
    %61 = vector.multi_reduction <add>, %59, %cst_31 [1] : vector<8x128xf32> to vector<8xf32>
    %62 = vector.shape_cast %61 : vector<8xf32> to vector<8x1xf32>
    %c0_32 = arith.constant 0 : index
    %c0_33 = arith.constant 0 : index
    %63 = vector.load %arg10[%c0_32, %c0_33] : memref<8x1xf32, #tpu.memory_space<vmem>>, vector<8x1xf32>
    tpu.vector_store %arg10[%c0_32, %c0_33], %62 {strides = array<i32>} : memref<8x1xf32, #tpu.memory_space<vmem>>, vector<8x1xf32>,
    return
  }
  func.func @transform_0(%arg0: i32) -> (i32, i32) {
    %c0_i32 = arith.constant 0 : i32
    %c0_i32_0 = arith.constant 0 : i32
    return %arg0, %c0_i32 : i32, i32
  }
  func.func @transform_1(%arg0: i32) -> (i32, i32) {
    %c0_i32 = arith.constant 0 : i32
    %c0_i32_0 = arith.constant 0 : i32
    return %arg0, %c0_i32 : i32, i32
  }
  func.func @transform_2(%arg0: i32) -> (i32, i32) {
    %c0_i32 = arith.constant 0 : i32
    %c0_i32_0 = arith.constant 0 : i32
    %c0_i32_1 = arith.constant 0 : i32
    return %c0_i32, %c0_i32_0 : i32, i32
  }
  func.func @transform_3(%arg0: i32) -> (i32, i32) {
    %c0_i32 = arith.constant 0 : i32
    %c0_i32_0 = arith.constant 0 : i32
    %c0_i32_1 = arith.constant 0 : i32
    return %c0_i32, %c0_i32_0 : i32, i32
  }
  func.func @transform_4(%arg0: i32) -> (i32, i32) {
    %c0_i32 = arith.constant 0 : i32
    %c0_i32_0 = arith.constant 0 : i32
    %c0_i32_1 = arith.constant 0 : i32
    return %c0_i32, %c0_i32_0 : i32, i32
  }
  func.func @transform_5(%arg0: i32) -> (i32, i32) {
    %c0_i32 = arith.constant 0 : i32
    %c0_i32_0 = arith.constant 0 : i32
    %c0_i32_1 = arith.constant 0 : i32
    return %c0_i32, %c0_i32_0 : i32, i32
  }
  func.func @transform_6(%arg0: i32) -> (i32, i32) {
    %c0_i32 = arith.constant 0 : i32
    %c0_i32_0 = arith.constant 0 : i32
    %c0_i32_1 = arith.constant 0 : i32
    return %c0_i32, %c0_i32_0 : i32, i32
  }
  func.func @transform_7(%arg0: i32) -> (i32, i32) {
    %c0_i32 = arith.constant 0 : i32
    %c0_i32_0 = arith.constant 0 : i32
    %c0_i32_1 = arith.constant 0 : i32
    return %c0_i32, %c0_i32_0 : i32, i32
  }
  func.func @transform_8(%arg0: i32) -> (i32, i32) {
    %c0_i32 = arith.constant 0 : i32
    %c0_i32_0 = arith.constant 0 : i32
    return %arg0, %c0_i32 : i32, i32
  }
  func.func @transform_9(%arg0: i32) -> (i32, i32) {
    %c0_i32 = arith.constant 0 : i32
    %c0_i32_0 = arith.constant 0 : i32
    return %arg0, %c0_i32 : i32, i32
  }
}

</mosaic_0001>

<llo_original>
// kernel: _lambda_.1
$region0: #{_lambda_.1}
  #allocation0 [shape = 'u32[]', space=smem, size = 0x4, offset = 0x4, fixed_abs, tag = 'smem constant byte address 0x4 - core index']
  #allocation1 [shape = 'u32[144,128]{1,0:T(1,128)}', space=vmem, size = 0x12000, scoped, tag = 'internal scratch']
  %s0 = inlined_call_operand.vmem [shape: bf16[24,128], index: 0, kind: input, shape index: {}]
  %s1 = inlined_call_operand.vmem [shape: f32[24,128], index: 1, kind: input, shape index: {}]
  %s2 = inlined_call_operand.vmem [shape: bf16[128,128], index: 2, kind: input, shape index: {}]
  %s3 = inlined_call_operand.vmem [shape: f32[1,128], index: 3, kind: input, shape index: {}]
  %s4 = inlined_call_operand.vmem [shape: bf16[128,128], index: 4, kind: input, shape index: {}]
  %s5 = inlined_call_operand.vmem [shape: f32[1,128], index: 5, kind: input, shape index: {}]
  %s6 = inlined_call_operand.vmem [shape: bf16[128,256], index: 6, kind: input, shape index: {}]
  %s7 = inlined_call_operand.vmem [shape: f32[1,256], index: 7, kind: input, shape index: {}]
  %s8 = inlined_call_operand.vmem [shape: f32[24,128], index: 8, kind: output, shape index: {0}]
  %s9 = inlined_call_operand.vmem [shape: f32[24,1], index: 9, kind: output, shape index: {1}]
  %10 = xla_tuple %s8, %s9
  %s11 = sld [smem:[#allocation0]]
  $region73: #{_lambda_.1} parent=0
    _
  %s13 = ssub.s32 1, %s11
  %s14 = scalar_select 0, %s13, %s11
  loop: start=0, step=1, limit=5
  $region2: #{_lambda_.1} parent=0 // loop_pre_header
    _
  $region3: #{_lambda_.1} parent=0 // loop_header
    %s16 = sphi 0, %s20
    %p17 = scmp.ge.s32.totalorder %s16, 5
    %s26 = sphi 0, %s28
    %s29 = sphi 0, %s26
    %s30 = sphi 0, %s29
    %s46 = sphi 0, %s30
    %s52 = sphi 0, %s54
    %s55 = sphi 0, %s52
    %s56 = sphi 0, %s55
    %s72 = sphi 0, %s56
    %s76 = sphi 0, %s76
    %s78 = sphi 0, %s76
    %s79 = sphi 0, %s78
    %s93 = sphi 0, %s79
    %s97 = sphi 0, %s97
    %s99 = sphi 0, %s97
    %s100 = sphi 0, %s99
    %s114 = sphi 0, %s100
    %s118 = sphi 0, %s118
    %s120 = sphi 0, %s118
    %s121 = sphi 0, %s120
    %s135 = sphi 0, %s121
    %s139 = sphi 0, %s139
    %s141 = sphi 0, %s139
    %s142 = sphi 0, %s141
    %s156 = sphi 0, %s142
    %s160 = sphi 0, %s160
    %s162 = sphi 0, %s160
    %s163 = sphi 0, %s162
    %s177 = sphi 0, %s163
    %s181 = sphi 0, %s181
    %s183 = sphi 0, %s181
    %s184 = sphi 0, %s183
    %s198 = sphi 0, %s184
    %s204 = sphi 0, %s206
    %s207 = sphi 0, %s204
    %s208 = sphi 0, %s207
    %s224 = sphi 0, %s208
    %s230 = sphi 0, %s232
    %s233 = sphi 0, %s230
    %s234 = sphi 0, %s233
    %s250 = sphi 0, %s234
  $region4: #{_lambda_.1} parent=0 // loop_header_branch
    %19 = sbr.rel (%p17) target = $region8
  $region5: #{_lambda_.1} parent=0 // loop_body
    %s21 = ssub.s32 %s16, 1
    %s22 = ssub.s32 %s16, 2
    %s23 = sadd.s32 %s16, 1
    %s24 = ssub.s32 %s16, %s23
    %p25 = scmp.eq.s32.totalorder %s24, 0
    %s27 = sadd.s32 %s26, 1
    %s28 = scalar_select %p25, %s26, %s27
    %p31 = pneg %p25
    %p32 = scmp.eq.s32.totalorder %s16, 2
    %p33 = por %p31, %p32
    %p34 = scmp.ne.s32.totalorder %s26, %s29
    %p35 = scmp.eq.s32.totalorder %s16, 0
    %p36 = por %p34, %p35
    %p37 = scmp.ne.s32.totalorder %s26, %s29
    %p38 = scmp.eq.s32.totalorder %s21, 2
    %p39 = por %p37, %p38
    %p40 = scmp.ne.s32.totalorder %s29, %s30
    %p41 = scmp.eq.s32.totalorder %s21, 0
    %p42 = por %p40, %p41
    %p43 = scmp.ne.s32.totalorder %s29, %s30
    %p44 = scmp.eq.s32.totalorder %s22, 2
    %p45 = por %p43, %p44
    %p47 = scmp.ne.s32.totalorder %s30, %s46
    %p48 = scmp.eq.s32.totalorder %s22, 0
    %p49 = por %p47, %p48
    %s50 = ssub.s32 %s16, %s23
    %p51 = scmp.eq.s32.totalorder %s50, 0
    %s53 = sadd.s32 %s52, 1
    %s54 = scalar_select %p51, %s52, %s53
    %p57 = pneg %p51
    %p58 = scmp.eq.s32.totalorder %s16, 2
    %p59 = por %p57, %p58
    %p60 = scmp.ne.s32.totalorder %s52, %s55
    %p61 = scmp.eq.s32.totalorder %s16, 0
    %p62 = por %p60, %p61
    %p63 = scmp.ne.s32.totalorder %s52, %s55
    %p64 = scmp.eq.s32.totalorder %s21, 2
    %p65 = por %p63, %p64
    %p66 = scmp.ne.s32.totalorder %s55, %s56
    %p67 = scmp.eq.s32.totalorder %s21, 0
    %p68 = por %p66, %p67
    %p69 = scmp.ne.s32.totalorder %s55, %s56
    %p70 = scmp.eq.s32.totalorder %s22, 2
    %p71 = por %p69, %p70
    %p73 = scmp.ne.s32.totalorder %s56, %s72
    %p74 = scmp.eq.s32.totalorder %s22, 0
    %p75 = por %p73, %p74
    %s77 = sadd.s32 %s76, 1
    %p80 = scmp.eq.s32.totalorder %s16, 2
    %p81 = scmp.ne.s32.totalorder %s76, %s78
    %p82 = scmp.eq.s32.totalorder %s16, 0
    %p83 = por %p81, %p82
    %p84 = scmp.ne.s32.totalorder %s76, %s78
    %p85 = scmp.eq.s32.totalorder %s21, 2
    %p86 = por %p84, %p85
    %p87 = scmp.ne.s32.totalorder %s78, %s79
    %p88 = scmp.eq.s32.totalorder %s21, 0
    %p89 = por %p87, %p88
    %p90 = scmp.ne.s32.totalorder %s78, %s79
    %p91 = scmp.eq.s32.totalorder %s22, 2
    %p92 = por %p90, %p91
    %p94 = scmp.ne.s32.totalorder %s79, %s93
    %p95 = scmp.eq.s32.totalorder %s22, 0
    %p96 = por %p94, %p95
    %s98 = sadd.s32 %s97, 1
    %p101 = scmp.eq.s32.totalorder %s16, 2
    %p102 = scmp.ne.s32.totalorder %s97, %s99
    %p103 = scmp.eq.s32.totalorder %s16, 0
    %p104 = por %p102, %p103
    %p105 = scmp.ne.s32.totalorder %s97, %s99
    %p106 = scmp.eq.s32.totalorder %s21, 2
    %p107 = por %p105, %p106
    %p108 = scmp.ne.s32.totalorder %s99, %s100
    %p109 = scmp.eq.s32.totalorder %s21, 0
    %p110 = por %p108, %p109
    %p111 = scmp.ne.s32.totalorder %s99, %s100
    %p112 = scmp.eq.s32.totalorder %s22, 2
    %p113 = por %p111, %p112
    %p115 = scmp.ne.s32.totalorder %s100, %s114
    %p116 = scmp.eq.s32.totalorder %s22, 0
    %p117 = por %p115, %p116
    %s119 = sadd.s32 %s118, 1
    %p122 = scmp.eq.s32.totalorder %s16, 2
    %p123 = scmp.ne.s32.totalorder %s118, %s120
    %p124 = scmp.eq.s32.totalorder %s16, 0
    %p125 = por %p123, %p124
    %p126 = scmp.ne.s32.totalorder %s118, %s120
    %p127 = scmp.eq.s32.totalorder %s21, 2
    %p128 = por %p126, %p127
    %p129 = scmp.ne.s32.totalorder %s120, %s121
    %p130 = scmp.eq.s32.totalorder %s21, 0
    %p131 = por %p129, %p130
    %p132 = scmp.ne.s32.totalorder %s120, %s121
    %p133 = scmp.eq.s32.totalorder %s22, 2
    %p134 = por %p132, %p133
    %p136 = scmp.ne.s32.totalorder %s121, %s135
    %p137 = scmp.eq.s32.totalorder %s22, 0
    %p138 = por %p136, %p137
    %s140 = sadd.s32 %s139, 1
    %p143 = scmp.eq.s32.totalorder %s16, 2
    %p144 = scmp.ne.s32.totalorder %s139, %s141
    %p145 = scmp.eq.s32.totalorder %s16, 0
    %p146 = por %p144, %p145
    %p147 = scmp.ne.s32.totalorder %s139, %s141
    %p148 = scmp.eq.s32.totalorder %s21, 2
    %p149 = por %p147, %p148
    %p150 = scmp.ne.s32.totalorder %s141, %s142
    %p151 = scmp.eq.s32.totalorder %s21, 0
    %p152 = por %p150, %p151
    %p153 = scmp.ne.s32.totalorder %s141, %s142
    %p154 = scmp.eq.s32.totalorder %s22, 2
    %p155 = por %p153, %p154
    %p157 = scmp.ne.s32.totalorder %s142, %s156
    %p158 = scmp.eq.s32.totalorder %s22, 0
    %p159 = por %p157, %p158
    %s161 = sadd.s32 %s160, 1
    %p164 = scmp.eq.s32.totalorder %s16, 2
    %p165 = scmp.ne.s32.totalorder %s160, %s162
    %p166 = scmp.eq.s32.totalorder %s16, 0
    %p167 = por %p165, %p166
    %p168 = scmp.ne.s32.totalorder %s160, %s162
    %p169 = scmp.eq.s32.totalorder %s21, 2
    %p170 = por %p168, %p169
    %p171 = scmp.ne.s32.totalorder %s162, %s163
    %p172 = scmp.eq.s32.totalorder %s21, 0
    %p173 = por %p171, %p172
    %p174 = scmp.ne.s32.totalorder %s162, %s163
    %p175 = scmp.eq.s32.totalorder %s22, 2
    %p176 = por %p174, %p175
    %p178 = scmp.ne.s32.totalorder %s163, %s177
    %p179 = scmp.eq.s32.totalorder %s22, 0
    %p180 = por %p178, %p179
    %s182 = sadd.s32 %s181, 1
    %p185 = scmp.eq.s32.totalorder %s16, 2
    %p186 = scmp.ne.s32.totalorder %s181, %s183
    %p187 = scmp.eq.s32.totalorder %s16, 0
    %p188 = por %p186, %p187
    %p189 = scmp.ne.s32.totalorder %s181, %s183
    %p190 = scmp.eq.s32.totalorder %s21, 2
    %p191 = por %p189, %p190
    %p192 = scmp.ne.s32.totalorder %s183, %s184
    %p193 = scmp.eq.s32.totalorder %s21, 0
    %p194 = por %p192, %p193
    %p195 = scmp.ne.s32.totalorder %s183, %s184
    %p196 = scmp.eq.s32.totalorder %s22, 2
    %p197 = por %p195, %p196
    %p199 = scmp.ne.s32.totalorder %s184, %s198
    %p200 = scmp.eq.s32.totalorder %s22, 0
    %p201 = por %p199, %p200
    %s202 = ssub.s32 %s16, %s23
    %p203 = scmp.eq.s32.totalorder %s202, 0
    %s205 = sadd.s32 %s204, 1
    %s206 = scalar_select %p203, %s204, %s205
    %p209 = pneg %p203
    %p210 = scmp.eq.s32.totalorder %s16, 2
    %p211 = por %p209, %p210
    %p212 = scmp.ne.s32.totalorder %s204, %s207
    %p213 = scmp.eq.s32.totalorder %s16, 0
    %p214 = por %p212, %p213
    %p215 = scmp.ne.s32.totalorder %s204, %s207
    %p216 = scmp.eq.s32.totalorder %s21, 2
    %p217 = por %p215, %p216
    %p218 = scmp.ne.s32.totalorder %s207, %s208
    %p219 = scmp.eq.s32.totalorder %s21, 0
    %p220 = por %p218, %p219
    %p221 = scmp.ne.s32.totalorder %s207, %s208
    %p222 = scmp.eq.s32.totalorder %s22, 2
    %p223 = por %p221, %p222
    %p225 = scmp.ne.s32.totalorder %s208, %s224
    %p226 = scmp.eq.s32.totalorder %s22, 0
    %p227 = por %p225, %p226
    %s228 = ssub.s32 %s16, %s23
    %p229 = scmp.eq.s32.totalorder %s228, 0
    %s231 = sadd.s32 %s230, 1
    %s232 = scalar_select %p229, %s230, %s231
    %p235 = pneg %p229
    %p236 = scmp.eq.s32.totalorder %s16, 2
    %p237 = por %p235, %p236
    %p238 = scmp.ne.s32.totalorder %s230, %s233
    %p239 = scmp.eq.s32.totalorder %s16, 0
    %p240 = por %p238, %p239
    %p241 = scmp.ne.s32.totalorder %s230, %s233
    %p242 = scmp.eq.s32.totalorder %s21, 2
    %p243 = por %p241, %p242
    %p244 = scmp.ne.s32.totalorder %s233, %s234
    %p245 = scmp.eq.s32.totalorder %s21, 0
    %p246 = por %p244, %p245
    %p247 = scmp.ne.s32.totalorder %s233, %s234
    %p248 = scmp.eq.s32.totalorder %s22, 2
    %p249 = por %p247, %p248
    %p251 = scmp.ne.s32.totalorder %s234, %s250
    %p252 = scmp.eq.s32.totalorder %s22, 0
    %p253 = por %p251, %p252
    %p254 = scmp.le.s32.totalorder 1, %s16
    %p255 = scmp.lt.s32.totalorder %s16, 4
    %p256 = pnand %p254, %p255
    %p257 = pneg %p256
    // Predicated region
    $region9: #{_lambda_.1} parent=5 // pred_check
      _
    $region10: #{_lambda_.1} parent=5 // pred_check_branch
      %259 = sbr.rel (%p256) target = $region12
    $region11: #{_lambda_.1} parent=5 // pred_region
      %s260 = ssub.s32 %s16, 1
      // Predicated region
      $region13: #{_lambda_.1} parent=11 // pred_check
        %p261 = pneg %p89
      $region14: #{_lambda_.1} parent=11 // pred_check_branch
        %263 = sbr.rel (%p261) target = $region16
      $region15: #{_lambda_.1} parent=11 // pred_region
        _
      $region16: #{_lambda_.1} parent=11 // pred_fallthru
        _
      // Predicated region
      $region17: #{_lambda_.1} parent=11 // pred_check
        %p264 = pneg %p110
      $region18: #{_lambda_.1} parent=11 // pred_check_branch
        %266 = sbr.rel (%p264) target = $region20
      $region19: #{_lambda_.1} parent=11 // pred_region
        _
      $region20: #{_lambda_.1} parent=11 // pred_fallthru
        _
      // Predicated region
      $region21: #{_lambda_.1} parent=11 // pred_check
        %p267 = pneg %p131
      $region22: #{_lambda_.1} parent=11 // pred_check_branch
        %269 = sbr.rel (%p267) target = $region24
      $region23: #{_lambda_.1} parent=11 // pred_region
        _
      $region24: #{_lambda_.1} parent=11 // pred_fallthru
        _
      // Predicated region
      $region25: #{_lambda_.1} parent=11 // pred_check
        %p270 = pneg %p152
      $region26: #{_lambda_.1} parent=11 // pred_check_branch
        %272 = sbr.rel (%p270) target = $region28
      $region27: #{_lambda_.1} parent=11 // pred_region
        _
      $region28: #{_lambda_.1} parent=11 // pred_fallthru
        _
      // Predicated region
      $region29: #{_lambda_.1} parent=11 // pred_check
        %p273 = pneg %p173
      $region30: #{_lambda_.1} parent=11 // pred_check_branch
        %275 = sbr.rel (%p273) target = $region32
      $region31: #{_lambda_.1} parent=11 // pred_region
        _
      $region32: #{_lambda_.1} parent=11 // pred_fallthru
        _
      // Predicated region
      $region33: #{_lambda_.1} parent=11 // pred_check
        %p276 = pneg %p194
      $region34: #{_lambda_.1} parent=11 // pred_check_branch
        %278 = sbr.rel (%p276) target = $region36
      $region35: #{_lambda_.1} parent=11 // pred_region
        _
      $region36: #{_lambda_.1} parent=11 // pred_fallthru
        _
    $region12: #{_lambda_.1} parent=5 // pred_fallthru
      _
    %p279 = scmp.lt.s32.totalorder %s16, 3
    // Predicated region
    $region37: #{_lambda_.1} parent=5 // pred_check
      %p280 = pneg %p279
    $region38: #{_lambda_.1} parent=5 // pred_check_branch
      %282 = sbr.rel (%p280) target = $region40
    $region39: #{_lambda_.1} parent=5 // pred_region
      // Predicated region
      $region41: #{_lambda_.1} parent=39 // pred_check
        %p283 = pneg %p36
      $region42: #{_lambda_.1} parent=39 // pred_check_branch
        %285 = sbr.rel (%p283) target = $region44
      $region43: #{_lambda_.1} parent=39 // pred_region
        %p286 = scmp.lt.s32.totalorder %s16, 2
        %s287 = scalar_select %p286, %s16, 2
        %s288 = smul.addr %s287, 4
        %s289 = scalar_lea.vmem %s0, %s288
      $region44: #{_lambda_.1} parent=39 // pred_fallthru
        _
      // Predicated region
      $region45: #{_lambda_.1} parent=39 // pred_check
        %p290 = pneg %p62
      $region46: #{_lambda_.1} parent=39 // pred_check_branch
        %292 = sbr.rel (%p290) target = $region48
      $region47: #{_lambda_.1} parent=39 // pred_region
        %p293 = scmp.lt.s32.totalorder %s16, 2
        %s294 = scalar_select %p293, %s16, 2
        %s295 = smul.addr %s294, 8
        %s296 = scalar_lea.vmem %s1, %s295
      $region48: #{_lambda_.1} parent=39 // pred_fallthru
        _
    $region40: #{_lambda_.1} parent=5 // pred_fallthru
      _
    %p297 = scmp.le.s32.totalorder 1, %s16
    %p298 = scmp.lt.s32.totalorder %s16, 4
    %p299 = pnand %p297, %p298
    %p300 = pneg %p299
    // Predicated region
    $region49: #{_lambda_.1} parent=5 // pred_check
      _
    $region50: #{_lambda_.1} parent=5 // pred_check_branch
      %302 = sbr.rel (%p299) target = $region52
    $region51: #{_lambda_.1} parent=5 // pred_region
      %s303 = ssub.s32 %s16, 1
      %p304 = scmp.lt.s32.totalorder %s21, 2
      %s305 = scalar_select %p304, %s21, 2
      %s306 = smul.addr %s305, 4
      %s307 = scalar_lea.vmem %s0, %s306
      %p308 = pneg %p42
      %p309 = pneg %p39
      %p310 = scmp.lt.s32.totalorder %s21, 2
      %s311 = scalar_select %p310, %s21, 2
      %s312 = smul.addr %s311, 8
      %s313 = scalar_lea.vmem %s1, %s312
      %p314 = pneg %p68
      %p315 = pneg %p65
      %p316 = pneg %p89
      %p317 = pneg %p86
      %p318 = pneg %p110
      %p319 = pneg %p107
      %p320 = pneg %p131
      %p321 = pneg %p128
      %p322 = pneg %p152
      %p323 = pneg %p149
      %p324 = pneg %p173
      %p325 = pneg %p170
      %p326 = pneg %p194
      %p327 = pneg %p191
      %p328 = pneg %p220
      %p329 = pneg %p217
      %p330 = scmp.lt.s32.totalorder %s21, 2
      %s331 = scalar_select %p330, %s21, 2
      %s332 = smul.addr %s331, 8
      %s333 = scalar_lea.vmem %s8, %s332
      %p334 = pneg %p246
      %p335 = pneg %p243
      %p336 = scmp.lt.s32.totalorder %s21, 2
      %s337 = scalar_select %p336, %s21, 2
      %s338 = smul.addr %s337, 8
      %s339 = scalar_lea.vmem %s9, %s338
      %p340 = scmp.lt.s32.totalorder %s21, 2
      %s341 = scalar_select %p340, %s21, 2
      %s342 = smul.addr %s341, 4
      %s343 = scalar_lea.vmem %s0, %s342
      %p344 = scmp.lt.s32.totalorder %s21, 2
      %s345 = scalar_select %p344, %s21, 2
      %s346 = smul.addr %s345, 8
      %s347 = scalar_lea.vmem %s1, %s346
      %p348 = scmp.lt.s32.totalorder %s21, 2
      %s349 = scalar_select %p348, %s21, 2
      %s350 = smul.addr %s349, 8
      %s351 = scalar_lea.vmem %s8, %s350
      %p352 = scmp.lt.s32.totalorder %s21, 2
      %s353 = scalar_select %p352, %s21, 2
      %s354 = smul.addr %s353, 8
      %s355 = scalar_lea.vmem %s9, %s354
      %v357 = vld [vmem:[%s343] sm:$0xf]
      %v358 = vld [vmem:[%s2] sm:$0xf]
      %v359 = vld [vmem:[%s2 + $0x4] sm:$0xf]
      %v360 = vld [vmem:[%s2 + $0x8] sm:$0xf]
      %v361 = vld [vmem:[%s2 + $0xc] sm:$0xf]
      %v362 = vld [vmem:[%s2 + $0x10] sm:$0xf]
      %v363 = vld [vmem:[%s2 + $0x14] sm:$0xf]
      %v364 = vld [vmem:[%s2 + $0x18] sm:$0xf]
      %v365 = vld [vmem:[%s2 + $0x1c] sm:$0xf]
      %v366 = vld [vmem:[%s2 + $0x20] sm:$0xf]
      %v367 = vld [vmem:[%s2 + $0x24] sm:$0xf]
      %v368 = vld [vmem:[%s2 + $0x28] sm:$0xf]
      %v369 = vld [vmem:[%s2 + $0x2c] sm:$0xf]
      %v370 = vld [vmem:[%s2 + $0x30] sm:$0xf]
      %v371 = vld [vmem:[%s2 + $0x34] sm:$0xf]
      %v372 = vld [vmem:[%s2 + $0x38] sm:$0xf]
      %v373 = vld [vmem:[%s2 + $0x3c] sm:$0xf]
      %v374 = vld [vmem:[%s3] sm:$0x1]
      %v376 = vlaneseq
      %v377 = vshrl.u32 %v376, 7
      %v378 = vsub.s32 0, %v377
      %v379 = vrot.slane %v374, %v378
      %v397 = vunpack.c.l.b16 %v358
      %v398 = vunpack.c.l.b16 %v359
      %v399 = vunpack.c.l.b16 %v360
      %v400 = vunpack.c.l.b16 %v361
      %v401 = vunpack.c.l.b16 %v362
      %v402 = vunpack.c.l.b16 %v363
      %v403 = vunpack.c.l.b16 %v364
      %v404 = vunpack.c.l.b16 %v365
      %v405 = vunpack.c.l.b16 %v366
      %v406 = vunpack.c.l.b16 %v367
      %v407 = vunpack.c.l.b16 %v368
      %v408 = vunpack.c.l.b16 %v369
      %v409 = vunpack.c.l.b16 %v370
      %v410 = vunpack.c.l.b16 %v371
      %v411 = vunpack.c.l.b16 %v372
      %v412 = vunpack.c.l.b16 %v373
      %v413 = vpack.c.b16 %v398, %v397
      %v414 = vpack.c.b16 %v400, %v399
      %v415 = vpack.c.b16 %v402, %v401
      %v416 = vpack.c.b16 %v404, %v403
      %v417 = vpack.c.b16 %v406, %v405
      %v418 = vpack.c.b16 %v408, %v407
      %v419 = vpack.c.b16 %v410, %v409
      %v420 = vpack.c.b16 %v412, %v411
      %429 = vmatprep.subr.bf16.mxu0 0
      %430 = vmatpush1.bf16.msra.mxu0 %v413
      %431 = vmatprep.subr.bf16.mxu0 0
      %432 = vmatpush1.bf16.msra.mxu0 %v414
      %433 = vmatprep.subr.bf16.mxu0 0
      %434 = vmatpush1.bf16.msra.mxu0 %v415
      %435 = vmatprep.subr.bf16.mxu0 0
      %436 = vmatpush1.bf16.msra.mxu0 %v416
      %437 = vmatprep.subr.bf16.mxu0 0
      %438 = vmatpush1.bf16.msra.mxu0 %v417
      %439 = vmatprep.subr.bf16.mxu0 0
      %440 = vmatpush1.bf16.msra.mxu0 %v418
      %441 = vmatprep.subr.bf16.mxu0 0
      %442 = vmatpush1.bf16.msra.mxu0 %v419
      %443 = vmatprep.subr.bf16.mxu0 0
      %444 = vmatpush1.bf16.msra.mxu0 %v420
      %445 = vmatprep.subr.bf16.mxu0 0
      %446 = vmatpush1.bf16.msra.mxu0 0
      %447 = vmatprep.subr.bf16.mxu0 0
      %448 = vmatpush1.bf16.msra.mxu0 0
      %449 = vmatprep.subr.bf16.mxu0 0
      %450 = vmatpush1.bf16.msra.mxu0 0
      %451 = vmatprep.subr.bf16.mxu0 0
      %452 = vmatpush1.bf16.msra.mxu0 0
      %453 = vmatprep.subr.bf16.mxu0 0
      %454 = vmatpush1.bf16.msra.mxu0 0
      %455 = vmatprep.subr.bf16.mxu0 0
      %456 = vmatpush1.bf16.msra.mxu0 0
      %457 = vmatprep.subr.bf16.mxu0 0
      %458 = vmatpush1.bf16.msra.mxu0 0
      %459 = vmatprep.subr.bf16.mxu0 0
      %460 = vmatpush1.bf16.msra.mxu0 0
      %461 = vmatprep.mubr.bf16.mxu0 0
      %462 = vmatmul.mubr.bf16.gmra.mrb[0].mxu0 %v357
      %v463 = vpop.f32.mrb[0].mxu0
      %v464 = vadd.f32 %v379, %v463
      %v465 = vpop.f32.mrb[0].mxu0
      %v466 = vpop.f32.mrb[0].mxu0
      %v467 = vpop.f32.mrb[0].mxu0
      %468 = vdwg.mxu0
      %v469 = vmax.f32 %v464, 0.0
      %v470 = vpack.c.bf16 %v469, %v469
      %v471 = vld [vmem:[%s4] sm:$0xf]
      %v472 = vld [vmem:[%s4 + $0x4] sm:$0xf]
      %v473 = vld [vmem:[%s4 + $0x8] sm:$0xf]
      %v474 = vld [vmem:[%s4 + $0xc] sm:$0xf]
      %v475 = vld [vmem:[%s4 + $0x10] sm:$0xf]
      %v476 = vld [vmem:[%s4 + $0x14] sm:$0xf]
      %v477 = vld [vmem:[%s4 + $0x18] sm:$0xf]
      %v478 = vld [vmem:[%s4 + $0x1c] sm:$0xf]
      %v479 = vld [vmem:[%s4 + $0x20] sm:$0xf]
      %v480 = vld [vmem:[%s4 + $0x24] sm:$0xf]
      %v481 = vld [vmem:[%s4 + $0x28] sm:$0xf]
      %v482 = vld [vmem:[%s4 + $0x2c] sm:$0xf]
      %v483 = vld [vmem:[%s4 + $0x30] sm:$0xf]
      %v484 = vld [vmem:[%s4 + $0x34] sm:$0xf]
      %v485 = vld [vmem:[%s4 + $0x38] sm:$0xf]
      %v486 = vld [vmem:[%s4 + $0x3c] sm:$0xf]
      %v487 = vld [vmem:[%s5] sm:$0x1]
      %v489 = vlaneseq
      %v490 = vshrl.u32 %v489, 7
      %v491 = vsub.s32 0, %v490
      %v492 = vrot.slane %v487, %v491
      %v510 = vunpack.c.l.b16 %v471
      %v511 = vunpack.c.l.b16 %v472
      %v512 = vunpack.c.l.b16 %v473
      %v513 = vunpack.c.l.b16 %v474
      %v514 = vunpack.c.l.b16 %v475
      %v515 = vunpack.c.l.b16 %v476
      %v516 = vunpack.c.l.b16 %v477
      %v517 = vunpack.c.l.b16 %v478
      %v518 = vunpack.c.l.b16 %v479
      %v519 = vunpack.c.l.b16 %v480
      %v520 = vunpack.c.l.b16 %v481
      %v521 = vunpack.c.l.b16 %v482
      %v522 = vunpack.c.l.b16 %v483
      %v523 = vunpack.c.l.b16 %v484
      %v524 = vunpack.c.l.b16 %v485
      %v525 = vunpack.c.l.b16 %v486
      %v526 = vpack.c.b16 %v511, %v510
      %v527 = vpack.c.b16 %v513, %v512
      %v528 = vpack.c.b16 %v515, %v514
      %v529 = vpack.c.b16 %v517, %v516
      %v530 = vpack.c.b16 %v519, %v518
      %v531 = vpack.c.b16 %v521, %v520
      %v532 = vpack.c.b16 %v523, %v522
      %v533 = vpack.c.b16 %v525, %v524
      %542 = vmatprep.subr.bf16.mxu0 0
      %543 = vmatpush1.bf16.msra.mxu0 %v526
      %544 = vmatprep.subr.bf16.mxu0 0
      %545 = vmatpush1.bf16.msra.mxu0 %v527
      %546 = vmatprep.subr.bf16.mxu0 0
      %547 = vmatpush1.bf16.msra.mxu0 %v528
      %548 = vmatprep.subr.bf16.mxu0 0
      %549 = vmatpush1.bf16.msra.mxu0 %v529
      %550 = vmatprep.subr.bf16.mxu0 0
      %551 = vmatpush1.bf16.msra.mxu0 %v530
      %552 = vmatprep.subr.bf16.mxu0 0
      %553 = vmatpush1.bf16.msra.mxu0 %v531
      %554 = vmatprep.subr.bf16.mxu0 0
      %555 = vmatpush1.bf16.msra.mxu0 %v532
      %556 = vmatprep.subr.bf16.mxu0 0
      %557 = vmatpush1.bf16.msra.mxu0 %v533
      %558 = vmatprep.subr.bf16.mxu0 0
      %559 = vmatpush1.bf16.msra.mxu0 0
      %560 = vmatprep.subr.bf16.mxu0 0
      %561 = vmatpush1.bf16.msra.mxu0 0
      %562 = vmatprep.subr.bf16.mxu0 0
      %563 = vmatpush1.bf16.msra.mxu0 0
      %564 = vmatprep.subr.bf16.mxu0 0
      %565 = vmatpush1.bf16.msra.mxu0 0
      %566 = vmatprep.subr.bf16.mxu0 0
      %567 = vmatpush1.bf16.msra.mxu0 0
      %568 = vmatprep.subr.bf16.mxu0 0
      %569 = vmatpush1.bf16.msra.mxu0 0
      %570 = vmatprep.subr.bf16.mxu0 0
      %571 = vmatpush1.bf16.msra.mxu0 0
      %572 = vmatprep.subr.bf16.mxu0 0
      %573 = vmatpush1.bf16.msra.mxu0 0
      %574 = vmatprep.mubr.bf16.mxu0 0
      %575 = vmatmul.mubr.bf16.gmra.mrb[0].mxu0 %v470
      %v576 = vpop.f32.mrb[0].mxu0
      %v577 = vadd.f32 %v492, %v576
      %v578 = vpop.f32.mrb[0].mxu0
      %v579 = vpop.f32.mrb[0].mxu0
      %v580 = vpop.f32.mrb[0].mxu0
      %581 = vdwg.mxu0
      %v582 = vmax.f32 %v577, 0.0
      %v583 = vpack.c.bf16 %v582, %v582
      %v584 = vld [vmem:[%s6] sm:$0xff]
      %v585 = vld [vmem:[%s6 + $0x8] sm:$0xff]
      %v586 = vld [vmem:[%s6 + $0x10] sm:$0xff]
      %v587 = vld [vmem:[%s6 + $0x18] sm:$0xff]
      %v588 = vld [vmem:[%s6 + $0x20] sm:$0xff]
      %v589 = vld [vmem:[%s6 + $0x28] sm:$0xff]
      %v590 = vld [vmem:[%s6 + $0x30] sm:$0xff]
      %v591 = vld [vmem:[%s6 + $0x38] sm:$0xff]
      %v592 = vld [vmem:[%s6 + $0x40] sm:$0xff]
      %v593 = vld [vmem:[%s6 + $0x48] sm:$0xff]
      %v594 = vld [vmem:[%s6 + $0x50] sm:$0xff]
      %v595 = vld [vmem:[%s6 + $0x58] sm:$0xff]
      %v596 = vld [vmem:[%s6 + $0x60] sm:$0xff]
      %v597 = vld [vmem:[%s6 + $0x68] sm:$0xff]
      %v598 = vld [vmem:[%s6 + $0x70] sm:$0xff]
      %v599 = vld [vmem:[%s6 + $0x78] sm:$0xff]
      %v600 = vld [vmem:[%s7] sm:$0x3]
      %v602 = vlaneseq
      %v603 = vshrl.u32 %v602, 7
      %v604 = vsub.s32 0, %v603
      %v605 = vrot.slane %v600, %v604
      %v606 = vlaneseq
      %v607 = vshrl.u32 %v606, 7
      %v608 = vsub.s32 1, %v607
      %v609 = vrot.slane %v600, %v608
      %v628 = vunpack.c.l.b16 %v584
      %v629 = vunpack.c.h.b16 %v584
      %v630 = vunpack.c.l.b16 %v585
      %v631 = vunpack.c.h.b16 %v585
      %v632 = vunpack.c.l.b16 %v586
      %v633 = vunpack.c.h.b16 %v586
      %v634 = vunpack.c.l.b16 %v587
      %v635 = vunpack.c.h.b16 %v587
      %v636 = vunpack.c.l.b16 %v588
      %v637 = vunpack.c.h.b16 %v588
      %v638 = vunpack.c.l.b16 %v589
      %v639 = vunpack.c.h.b16 %v589
      %v640 = vunpack.c.l.b16 %v590
      %v641 = vunpack.c.h.b16 %v590
      %v642 = vunpack.c.l.b16 %v591
      %v643 = vunpack.c.h.b16 %v591
      %v644 = vunpack.c.l.b16 %v592
      %v645 = vunpack.c.h.b16 %v592
      %v646 = vunpack.c.l.b16 %v593
      %v647 = vunpack.c.h.b16 %v593
      %v648 = vunpack.c.l.b16 %v594
      %v649 = vunpack.c.h.b16 %v594
      %v650 = vunpack.c.l.b16 %v595
      %v651 = vunpack.c.h.b16 %v595
      %v652 = vunpack.c.l.b16 %v596
      %v653 = vunpack.c.h.b16 %v596
      %v654 = vunpack.c.l.b16 %v597
      %v655 = vunpack.c.h.b16 %v597
      %v656 = vunpack.c.l.b16 %v598
      %v657 = vunpack.c.h.b16 %v598
      %v658 = vunpack.c.l.b16 %v599
      %v659 = vunpack.c.h.b16 %v599
      %v660 = vpack.c.b16 %v630, %v628
      %v661 = vpack.c.b16 %v631, %v629
      %v662 = vpack.c.b16 %v634, %v632
      %v663 = vpack.c.b16 %v635, %v633
      %v664 = vpack.c.b16 %v638, %v636
      %v665 = vpack.c.b16 %v639, %v637
      %v666 = vpack.c.b16 %v642, %v640
      %v667 = vpack.c.b16 %v643, %v641
      %v668 = vpack.c.b16 %v646, %v644
      %v669 = vpack.c.b16 %v647, %v645
      %v670 = vpack.c.b16 %v650, %v648
      %v671 = vpack.c.b16 %v651, %v649
      %v672 = vpack.c.b16 %v654, %v652
      %v673 = vpack.c.b16 %v655, %v653
      %v674 = vpack.c.b16 %v658, %v656
      %v675 = vpack.c.b16 %v659, %v657
      %692 = vmatprep.subr.bf16.mxu0 %v661
      %693 = vmatpush1.bf16.msra.mxu0 %v660
      %694 = vmatprep.subr.bf16.mxu0 %v663
      %695 = vmatpush1.bf16.msra.mxu0 %v662
      %696 = vmatprep.subr.bf16.mxu0 %v665
      %697 = vmatpush1.bf16.msra.mxu0 %v664
      %698 = vmatprep.subr.bf16.mxu0 %v667
      %699 = vmatpush1.bf16.msra.mxu0 %v666
      %700 = vmatprep.subr.bf16.mxu0 %v669
      %701 = vmatpush1.bf16.msra.mxu0 %v668
      %702 = vmatprep.subr.bf16.mxu0 %v671
      %703 = vmatpush1.bf16.msra.mxu0 %v670
      %704 = vmatprep.subr.bf16.mxu0 %v673
      %705 = vmatpush1.bf16.msra.mxu0 %v672
      %706 = vmatprep.subr.bf16.mxu0 %v675
      %707 = vmatpush1.bf16.msra.mxu0 %v674
      %708 = vmatprep.subr.bf16.mxu0 0
      %709 = vmatpush1.bf16.msra.mxu0 0
      %710 = vmatprep.subr.bf16.mxu0 0
      %711 = vmatpush1.bf16.msra.mxu0 0
      %712 = vmatprep.subr.bf16.mxu0 0
      %713 = vmatpush1.bf16.msra.mxu0 0
      %714 = vmatprep.subr.bf16.mxu0 0
      %715 = vmatpush1.bf16.msra.mxu0 0
      %716 = vmatprep.subr.bf16.mxu0 0
      %717 = vmatpush1.bf16.msra.mxu0 0
      %718 = vmatprep.subr.bf16.mxu0 0
      %719 = vmatpush1.bf16.msra.mxu0 0
      %720 = vmatprep.subr.bf16.mxu0 0
      %721 = vmatpush1.bf16.msra.mxu0 0
      %722 = vmatprep.subr.bf16.mxu0 0
      %723 = vmatpush1.bf16.msra.mxu0 0
      %724 = vmatprep.mubr.bf16.mxu0 0
      %725 = vmatmul.mubr.bf16.gmra.mrb[0].mxu0 %v583
      %v726 = vpop.f32.mrb[0].mxu0
      %v727 = vadd.f32 %v605, %v726
      %v728 = vpop.f32.mrb[0].mxu0
      %v729 = vadd.f32 %v609, %v728
      %v730 = vpop.f32.mrb[0].mxu0
      %v731 = vpop.f32.mrb[0].mxu0
      %732 = vdwg.mxu0
      %v733 = vmax.f32 %v729, -20.0
      %v734 = vmin.f32 %v733, 2.0
      %v735 = vld [vmem:[%s347] sm:$0xff]
      %v736 = vmul.f32 %v734, 1.442695
      %v737 = vpow.pop %v736
      %v738 = vmul.f32 %v737, %v735
      %v739 = vadd.f32 %v727, %v738
      %v740 = vmul.f32 %v735, %v735
      %v741 = vmul.f32 %v740, -0.5
      %v742 = vsub.f32 %v741, %v734
      %v743 = vsub.f32 %v742, 0.9189385
      %v744 = vtanh.pop %v739
      %v745 = vmul.f32 %v739, -2.0
      %v746 = vmax.f32 %v745, 0.0
      %v747 = vand.u32 2147483647, %v745
      %v748 = vsub.f32 0.0, %v747
      %v749 = vmul.f32 %v748, 1.442695
      %v750 = vpow.pop %v749
      %v751 = vadd.f32 %v750, 1.0
      %v752 = vlog2.pop %v751
      %v753 = vmul.f32 %v752, 0.6931472
      %v754 = vmul.f32 -0.5, %v750
      %v755 = vadd.f32 %v754, 1.0
      %v756 = vmul.f32 %v755, %v750
      %v757 = vand.u32 2147483647, %v750
      %vm758 = vcmp.lt.f32.partialorder %v757, 0.0004427343
      %v759 = vsel %vm758, %v756, %v753
      %v760 = vadd.f32 %v746, %v759
      %v761 = vsub.f32 0.6931472, %v739
      %v762 = vsub.f32 %v761, %v760
      %v763 = vmul.f32 %v762, 2.0
      %v764 = vsub.f32 %v743, %v763
      %v765 = vlaneseq
      %v766 = vand.u32 %v765, 127
      %vm767 = vcmp.lt.s32.totalorder %v766, 4
      %v768 = vsel %vm767, %v764, 0.0
      %769 = vst [vmem:[%s351] sm:$0xff] %v744
      %770 = vadd.xlane.f32.xlu0 %v768
      %v771 = vpop.xlane.xlu0 %770
      %vm772 = vcmask 7168
      %773 = vst.msk [vmem:[%s355] sm:$0xff] %vm772, %v771
      %p774 = scmp.lt.s32.totalorder %s21, 2
      %s775 = scalar_select %p774, %s21, 2
      %s776 = smul.addr %s775, 8
      %s777 = scalar_lea.vmem %s8, %s776
      %p778 = scmp.lt.s32.totalorder %s21, 2
      %s779 = scalar_select %p778, %s21, 2
      %s780 = smul.addr %s779, 8
      %s781 = scalar_lea.vmem %s9, %s780
      // Predicated region
      $region53: #{_lambda_.1} parent=51 // pred_check
        %p782 = pneg %p217
      $region54: #{_lambda_.1} parent=51 // pred_check_branch
        %784 = sbr.rel (%p782) target = $region56
      $region55: #{_lambda_.1} parent=51 // pred_region
        _
      $region56: #{_lambda_.1} parent=51 // pred_fallthru
        _
      // Predicated region
      $region57: #{_lambda_.1} parent=51 // pred_check
        %p785 = pneg %p243
      $region58: #{_lambda_.1} parent=51 // pred_check_branch
        %787 = sbr.rel (%p785) target = $region60
      $region59: #{_lambda_.1} parent=51 // pred_region
        _
      $region60: #{_lambda_.1} parent=51 // pred_fallthru
        _
    $region52: #{_lambda_.1} parent=5 // pred_fallthru
      _
    %p788 = scmp.le.s32.totalorder 2, %s16
    // Predicated region
    $region61: #{_lambda_.1} parent=5 // pred_check
      %p789 = pneg %p788
    $region62: #{_lambda_.1} parent=5 // pred_check_branch
      %791 = sbr.rel (%p789) target = $region64
    $region63: #{_lambda_.1} parent=5 // pred_region
      %s792 = ssub.s32 %s16, 2
      // Predicated region
      $region65: #{_lambda_.1} parent=63 // pred_check
        %p793 = pneg %p223
      $region66: #{_lambda_.1} parent=63 // pred_check_branch
        %795 = sbr.rel (%p793) target = $region68
      $region67: #{_lambda_.1} parent=63 // pred_region
        %p796 = scmp.lt.s32.totalorder %s22, 2
        %s797 = scalar_select %p796, %s22, 2
        %s798 = smul.addr %s797, 8
        %s799 = scalar_lea.vmem %s8, %s798
      $region68: #{_lambda_.1} parent=63 // pred_fallthru
        _
      // Predicated region
      $region69: #{_lambda_.1} parent=63 // pred_check
        %p800 = pneg %p249
      $region70: #{_lambda_.1} parent=63 // pred_check_branch
        %802 = sbr.rel (%p800) target = $region72
      $region71: #{_lambda_.1} parent=63 // pred_region
        %p803 = scmp.lt.s32.totalorder %s22, 2
        %s804 = scalar_select %p803, %s22, 2
        %s805 = smul.addr %s804, 8
        %s806 = scalar_lea.vmem %s9, %s805
      $region72: #{_lambda_.1} parent=63 // pred_fallthru
        _
    $region64: #{_lambda_.1} parent=5 // pred_fallthru
      _
  $region6: #{_lambda_.1} parent=0 // loop_footer
    %s20 = sadd.s32 1, %s16
  $region7: #{_lambda_.1} parent=0 // loop_footer_branch
    %15 = sbr.rel target = $region3
  $region8: #{_lambda_.1} parent=0 // loop_exit
    _

</llo_original>
